<compile_context>
chip_gen: v7x
topology: tpu7x:2x2x1
jax: 0.10.0
libtpu: 0.0.40
codegen_flags: <defaults>
</compile_context>

<pallas_src>
import functools
import math

import jax
import jax.numpy as jnp
from jax.experimental import pallas as pl
from jax.experimental.pallas import tpu as pltpu


def _c_attention_kernel(x_ref, wqkv_ref, bqkv_ref, wo_ref, bo_ref, out_ref,
                        *maybe_attn_ref, heads, dim_head):
    f32 = jnp.float32
    attn_out_ref = maybe_attn_ref[0] if maybe_attn_ref else None

    x = x_ref[0]                                   # (N, dim) in compute dtype (bf16)
    cdt = x.dtype
    n = x.shape[0]
    inner = heads * dim_head
    dh = dim_head

    # Fused QKV projection: one wide bf16 MXU matmul, f32 accumulation + f32 bias,
    # then a single cast back to the compute dtype.
    qkv = jnp.dot(x, wqkv_ref[...], preferred_element_type=f32) + bqkv_ref[...]
    qkv = qkv.astype(cdt)                          # (N, 3*inner)

    # Split heads once (static slices + stack) -> (heads, N, dim_head); the matmuls
    # below are batched over the leading heads axis (no slicing inside the hot loop).
    def heads_first(base):
        return jnp.stack(
            [qkv[:, base + h * dh:base + (h + 1) * dh] for h in range(heads)], axis=0)

    q = heads_first(0)
    k = heads_first(inner)
    v = heads_first(2 * inner)

    # Scores for all heads at once: batched dot_general over heads, f32 accumulation.
    scale = 1.0 / math.sqrt(dim_head)
    dots = jax.lax.dot_general(
        q, k, dimension_numbers=(((2,), (2,)), ((0,), (0,))),
        preferred_element_type=f32) * scale        # (heads, N, N)

    # Numerically-stable softmax in f32 (exact reciprocal: attn is an exported output).
    dots = dots - jnp.max(dots, axis=-1, keepdims=True)
    e = jnp.exp(dots)
    attn = e * pl.reciprocal(jnp.sum(e, axis=-1, keepdims=True), approx=False)

    if attn_out_ref is not None:
        attn_out_ref[0] = attn.astype(attn_out_ref.dtype)

    # Context for all heads: batched attn @ v.
    ctx = jax.lax.dot_general(
        attn.astype(cdt), v, dimension_numbers=(((2,), (1,)), ((0,), (0,))),
        preferred_element_type=f32)                # (heads, N, dim_head)

    # Merge heads 'h n d -> n (h d)' and run ONE full-width output projection
    # (contracts over inner = heads*dim_head, not per-head dim_head).
    ctx_flat = jnp.concatenate([ctx[h] for h in range(heads)], axis=-1).astype(cdt)
    out = jnp.dot(ctx_flat, wo_ref[...], preferred_element_type=f32) + bo_ref[...]
    out_ref[0] = out.astype(out_ref.dtype)


def _vmem_limit_bytes(bytes_needed):
    """Generation-aware VMEM request: physical capacity minus headroom."""
    try:
        cap = int(pltpu.get_tpu_info().vmem_capacity_bytes)
    except Exception:                       # conservative fallback (v7x-sized)
        cap = 64 * 1024 * 1024
    usable = cap - max(8 << 20, cap // 8)   # ~56 MiB on v7x, ~112 MiB on v5e/v6e
    return int(max(32 << 20, min(usable, bytes_needed)))


def c_attention(x, params, heads, dim_head, *, compute_dtype=jnp.bfloat16,
                attn_dtype=jnp.bfloat16, return_attn=True):
    """x: [B, N, dim] -> (out [B, N, dim], attn [B, heads, N, N]) or just out."""
    wq, bq, wk, bk, wv, bv, wo, bo = params
    B, N, dim = x.shape
    inner = heads * dim_head
    assert wq.shape == (dim, inner) and wk.shape == (dim, inner)
    assert wv.shape == (dim, inner) and wo.shape == (inner, dim)

    # Fused QKV weight / bias; bf16 matmul operands, f32 biases.
    x_c = x.astype(compute_dtype)
    wqkv = jnp.concatenate([wq, wk, wv], axis=1).astype(compute_dtype)   # (dim, 3*inner)
    bqkv = jnp.concatenate([bq, bk, bv]).reshape(1, 3 * inner).astype(jnp.float32)
    wo_c = wo.astype(compute_dtype)                                      # (inner, dim)
    bo_r = bo.reshape(1, dim).astype(jnp.float32)

    isz_c = jnp.dtype(compute_dtype).itemsize
    isz_x = jnp.dtype(x.dtype).itemsize
    isz_a = jnp.dtype(attn_dtype).itemsize

    # Rough VMEM budget: double-buffered activation/output blocks + resident weights
    # (constant index_maps -> fetched once) + live f32 intermediates, plus headroom.
    weight_bytes = (3 * dim * inner + inner * dim) * isz_c + (3 * inner + dim) * 4
    block_bytes = N * dim * isz_c + N * dim * isz_x
    if return_attn:
        block_bytes += heads * N * N * isz_a
    live_bytes = (2 * N * 3 * inner * (4 + isz_c)
                  + heads * N * N * (3 * 4 + isz_c)
                  + N * inner * (4 + isz_c) + N * dim * 4)
    vmem_limit = _vmem_limit_bytes(
        2 * weight_bytes + 2 * block_bytes + live_bytes + (2 << 20))

    flops = int(B * (2 * N * dim * 3 * inner            # fused QKV projection
                     + 4 * heads * N * N * dim_head     # scores + attn @ v
                     + 2 * N * inner * dim))            # output projection
    bytes_accessed = int(B * N * dim * isz_c + weight_bytes + B * N * dim * isz_x)
    if return_attn:
        bytes_accessed += int(B * heads * N * N * isz_a)
    cost = pl.CostEstimate(flops=flops,
                           transcendentals=int(B * heads * N * N),
                           bytes_accessed=bytes_accessed)

    kernel = functools.partial(_c_attention_kernel, heads=heads, dim_head=dim_head)

    if return_attn:
        out_shape = (jax.ShapeDtypeStruct((B, N, dim), x.dtype),
                     jax.ShapeDtypeStruct((B, heads, N, N), attn_dtype))
        out_specs = (pl.BlockSpec((1, N, dim), lambda b: (b, 0, 0)),
                     pl.BlockSpec((1, heads, N, N), lambda b: (b, 0, 0, 0)))
    else:
        out_shape = jax.ShapeDtypeStruct((B, N, dim), x.dtype)
        out_specs = pl.BlockSpec((1, N, dim), lambda b: (b, 0, 0))

    result = pl.pallas_call(
        kernel,
        out_shape=out_shape,
        grid_spec=pltpu.PrefetchScalarGridSpec(
            num_scalar_prefetch=0,
            grid=(B,),
            in_specs=[
                pl.BlockSpec((1, N, dim), lambda b: (b, 0, 0)),      # x
                pl.BlockSpec((dim, 3 * inner), lambda b: (0, 0)),    # Wqkv (VMEM-resident)
                pl.BlockSpec((1, 3 * inner), lambda b: (0, 0)),      # b_qkv
                pl.BlockSpec((inner, dim), lambda b: (0, 0)),        # Wo
                pl.BlockSpec((1, dim), lambda b: (0, 0)),            # bo
            ],
            out_specs=out_specs,
        ),
        compiler_params=pltpu.CompilerParams(
            dimension_semantics=("parallel",),
            vmem_limit_bytes=vmem_limit),
        cost_estimate=cost,
    )(x_c, wqkv, bqkv, wo_c, bo_r)

    if return_attn:
        out, attn = result
        return out, attn
    return result


def init_params(key, dim, heads, dim_head, dtype=jnp.float32):
    """nn.Linear-style init; weights stored transposed to (in_features, out_features)."""
    inner = heads * dim_head
    ks = jax.random.split(key, 8)

    def lin(kw, kb, fan_in, fan_out):
        bound = 1.0 / math.sqrt(fan_in)
        w = jax.random.uniform(kw, (fan_in, fan_out), dtype, -bound, bound)
        b = jax.random.uniform(kb, (fan_out,), dtype, -bound, bound)
        return w, b

    wq, bq = lin(ks[0], ks[1], dim, inner)
    wk, bk = lin(ks[2], ks[3], dim, inner)
    wv, bv = lin(ks[4], ks[5], dim, inner)
    wo, bo = lin(ks[6], ks[7], inner, dim)
    return (wq, bq, wk, bk, wv, bv, wo, bo)


def _reference(x, params, heads, dim_head):
    """Pure-JAX f32 reference mirroring the PyTorch forward (eval mode)."""
    wq, bq, wk, bk, wv, bv, wo, bo = params
    hp = jax.lax.Precision.HIGHEST
    B, N, _ = x.shape
    q = jnp.matmul(x, wq, precision=hp) + bq
    k = jnp.matmul(x, wk, precision=hp) + bk
    v = jnp.matmul(x, wv, precision=hp) + bv

    def split(t):
        return t.reshape(B, N, heads, dim_head).transpose(0, 2, 1, 3)

    q, k, v = split(q), split(k), split(v)
    dots = jnp.einsum('bhid,bhjd->bhij', q, k, precision=hp) / math.sqrt(dim_head)
    attn = jax.nn.softmax(dots, axis=-1)
    out = jnp.einsum('bhij,bhjd->bhid', attn, v, precision=hp)
    out = out.transpose(0, 2, 1, 3).reshape(B, N, heads * dim_head)
    y = jnp.matmul(out, wo, precision=hp) + bo
    return y, attn


if __name__ == "__main__":
    key = jax.random.PRNGKey(0)
    k_x, k_p = jax.random.split(key)

    # Small shapes consistent with the module.
    batch, seq, dim, heads, dim_head = 2, 16, 32, 4, 8   # inner_dim = 32

    x = jax.random.normal(k_x, (batch, seq, dim), dtype=jnp.float32)
    params = init_params(k_p, dim, heads, dim_head)

    out, attn = c_attention(x, params, heads, dim_head)
    out = jax.block_until_ready(out)
    attn = jax.block_until_ready(attn)

    out_ref, attn_ref = _reference(x, params, heads, dim_head)

    assert out.shape == (batch, seq, dim), out.shape
    assert attn.shape == (batch, heads, seq, seq), attn.shape

    attn_f32 = attn.astype(jnp.float32)
    # bf16 MXU operands (f32 accumulation) + bf16 attn output -> bf16-level tolerances.
    assert jnp.allclose(out, out_ref, atol=5e-2, rtol=5e-2), "output mismatch vs reference"
    assert jnp.allclose(attn_f32, attn_ref, atol=3e-2, rtol=3e-2), "attn mismatch vs reference"
    assert jnp.allclose(jnp.sum(attn_f32, axis=-1), 1.0, atol=2e-2), "attn rows not normalized"

    # Fast path that skips materializing attn entirely (review: attn writeback dominates HBM).
    out_only = c_attention(x, params, heads, dim_head, return_attn=False)
    out_only = jax.block_until_ready(out_only)
    assert out_only.shape == (batch, seq, dim), out_only.shape
    assert jnp.allclose(out_only, out_ref, atol=5e-2, rtol=5e-2), "no-attn output mismatch"

    print("KERNEL_OK")
</pallas_src>

<mosaic_0001>
module attributes {stable_mosaic.version = 11 : i64} {
  func.func @_c_attention_kernel(%arg0: i32, %arg1: memref<1x16x32xbf16, #tpu.memory_space<vmem>>, %arg2: memref<32x96xbf16, #tpu.memory_space<vmem>>, %arg3: memref<1x96xf32, #tpu.memory_space<vmem>>, %arg4: memref<32x32xbf16, #tpu.memory_space<vmem>>, %arg5: memref<1x32xf32, #tpu.memory_space<vmem>>, %arg6: memref<1x16x32xf32, #tpu.memory_space<vmem>>, %arg7: memref<1x4x16x16xbf16, #tpu.memory_space<vmem>>) attributes {dimension_semantics = [#tpu.dimension_semantics<parallel>], iteration_bounds = array<i64: 2>, scalar_prefetch = 0 : i64, scratch_operands = 0 : i64, tpu.core_type = #tpu.core_type<tc>, window_params = [{transform_indices = @transform_0, window_bounds = array<i64: 1, 16, 32>}, {pipeline_mode = #tpu.pipeline_mode<synchronous>, transform_indices = @transform_1, window_bounds = array<i64: 32, 96>}, {pipeline_mode = #tpu.pipeline_mode<synchronous>, transform_indices = @transform_2, window_bounds = array<i64: 1, 96>}, {pipeline_mode = #tpu.pipeline_mode<synchronous>, transform_indices = @transform_3, window_bounds = array<i64: 32, 32>}, {pipeline_mode = #tpu.pipeline_mode<synchronous>, transform_indices = @transform_4, window_bounds = array<i64: 1, 32>}, {transform_indices = @transform_5, window_bounds = array<i64: 1, 16, 32>}, {transform_indices = @transform_6, window_bounds = array<i64: 1, 4, 16, 16>}]} {
    %c0 = arith.constant 0 : index
    %c0_0 = arith.constant 0 : index
    %c0_1 = arith.constant 0 : index
    %0 = vector.load %arg1[%c0, %c0_0, %c0_1] : memref<1x16x32xbf16, #tpu.memory_space<vmem>>, vector<1x16x32xbf16>
    %1 = vector.shape_cast %0 : vector<1x16x32xbf16> to vector<16x32xbf16>
    %c0_2 = arith.constant 0 : index
    %c0_3 = arith.constant 0 : index
    %2 = vector.load %arg2[%c0_2, %c0_3] : memref<32x96xbf16, #tpu.memory_space<vmem>>, vector<32x96xbf16>
    %cst = arith.constant dense<0.000000e+00> : vector<16x96xf32>
    %3 = tpu.matmul %1, %2, %cst {dimension_numbers = #tpu.dot_dimension_numbers<[1], [0], [0], [1], [0, 0, 1, 1], [], []>} : vector<16x32xbf16>, vector<32x96xbf16>, vector<16x96xf32> -> vector<16x96xf32>
    %c0_4 = arith.constant 0 : index
    %c0_5 = arith.constant 0 : index
    %4 = vector.load %arg3[%c0_4, %c0_5] : memref<1x96xf32, #tpu.memory_space<vmem>>, vector<1x96xf32>
    %5 = vector.broadcast %4 : vector<1x96xf32> to vector<16x96xf32>
    %6 = arith.addf %3, %5 : vector<16x96xf32>
    %7 = arith.truncf %6 : vector<16x96xf32> to vector<16x96xbf16>
    %8 = vector.extract_strided_slice %7 {offsets = [0, 0], sizes = [16, 8], strides = [1, 1]} : vector<16x96xbf16> to vector<16x8xbf16>
    %9 = vector.extract_strided_slice %7 {offsets = [0, 8], sizes = [16, 8], strides = [1, 1]} : vector<16x96xbf16> to vector<16x8xbf16>
    %10 = vector.extract_strided_slice %7 {offsets = [0, 16], sizes = [16, 8], strides = [1, 1]} : vector<16x96xbf16> to vector<16x8xbf16>
    %11 = vector.extract_strided_slice %7 {offsets = [0, 24], sizes = [16, 8], strides = [1, 1]} : vector<16x96xbf16> to vector<16x8xbf16>
    %12 = vector.shape_cast %8 : vector<16x8xbf16> to vector<1x16x8xbf16>
    %13 = vector.shape_cast %9 : vector<16x8xbf16> to vector<1x16x8xbf16>
    %14 = vector.shape_cast %10 : vector<16x8xbf16> to vector<1x16x8xbf16>
    %15 = vector.shape_cast %11 : vector<16x8xbf16> to vector<1x16x8xbf16>
    %16 = tpu.concatenate %12, %13, %14, %15 in 0 : vector<1x16x8xbf16>, vector<1x16x8xbf16>, vector<1x16x8xbf16>, vector<1x16x8xbf16> -> vector<4x16x8xbf16>
    %17 = vector.extract_strided_slice %7 {offsets = [0, 32], sizes = [16, 8], strides = [1, 1]} : vector<16x96xbf16> to vector<16x8xbf16>
    %18 = vector.extract_strided_slice %7 {offsets = [0, 40], sizes = [16, 8], strides = [1, 1]} : vector<16x96xbf16> to vector<16x8xbf16>
    %19 = vector.extract_strided_slice %7 {offsets = [0, 48], sizes = [16, 8], strides = [1, 1]} : vector<16x96xbf16> to vector<16x8xbf16>
    %20 = vector.extract_strided_slice %7 {offsets = [0, 56], sizes = [16, 8], strides = [1, 1]} : vector<16x96xbf16> to vector<16x8xbf16>
    %21 = vector.shape_cast %17 : vector<16x8xbf16> to vector<1x16x8xbf16>
    %22 = vector.shape_cast %18 : vector<16x8xbf16> to vector<1x16x8xbf16>
    %23 = vector.shape_cast %19 : vector<16x8xbf16> to vector<1x16x8xbf16>
    %24 = vector.shape_cast %20 : vector<16x8xbf16> to vector<1x16x8xbf16>
    %25 = tpu.concatenate %21, %22, %23, %24 in 0 : vector<1x16x8xbf16>, vector<1x16x8xbf16>, vector<1x16x8xbf16>, vector<1x16x8xbf16> -> vector<4x16x8xbf16>
    %26 = vector.extract_strided_slice %7 {offsets = [0, 64], sizes = [16, 8], strides = [1, 1]} : vector<16x96xbf16> to vector<16x8xbf16>
    %27 = vector.extract_strided_slice %7 {offsets = [0, 72], sizes = [16, 8], strides = [1, 1]} : vector<16x96xbf16> to vector<16x8xbf16>
    %28 = vector.extract_strided_slice %7 {offsets = [0, 80], sizes = [16, 8], strides = [1, 1]} : vector<16x96xbf16> to vector<16x8xbf16>
    %29 = vector.extract_strided_slice %7 {offsets = [0, 88], sizes = [16, 8], strides = [1, 1]} : vector<16x96xbf16> to vector<16x8xbf16>
    %30 = vector.shape_cast %26 : vector<16x8xbf16> to vector<1x16x8xbf16>
    %31 = vector.shape_cast %27 : vector<16x8xbf16> to vector<1x16x8xbf16>
    %32 = vector.shape_cast %28 : vector<16x8xbf16> to vector<1x16x8xbf16>
    %33 = vector.shape_cast %29 : vector<16x8xbf16> to vector<1x16x8xbf16>
    %34 = tpu.concatenate %30, %31, %32, %33 in 0 : vector<1x16x8xbf16>, vector<1x16x8xbf16>, vector<1x16x8xbf16>, vector<1x16x8xbf16> -> vector<4x16x8xbf16>
    %cst_6 = arith.constant dense<0.000000e+00> : vector<4x16x16xf32>
    %35 = tpu.matmul %16, %25, %cst_6 {dimension_numbers = #tpu.dot_dimension_numbers<[2], [2], [1], [1], [0, 0, 0, 1, 1, 1], [0], [0]>} : vector<4x16x8xbf16>, vector<4x16x8xbf16>, vector<4x16x16xf32> -> vector<4x16x16xf32>
    %cst_7 = arith.constant 0.353553385 : f32
    %36 = vector.broadcast %cst_7 : f32 to vector<4x16x16xf32>
    %37 = arith.mulf %35, %36 : vector<4x16x16xf32>
    %cst_8 = arith.constant dense<0xFF800000> : vector<4x16xf32>
    %38 = vector.multi_reduction <maximumf>, %37, %cst_8 [2] : vector<4x16x16xf32> to vector<4x16xf32>
    %39 = vector.shape_cast %38 : vector<4x16xf32> to vector<4x16x1xf32>
    %40 = vector.broadcast %39 : vector<4x16x1xf32> to vector<4x16x16xf32>
    %41 = arith.subf %37, %40 : vector<4x16x16xf32>
    %42 = math.exp %41 : vector<4x16x16xf32>
    %cst_9 = arith.constant dense<0.000000e+00> : vector<4x16xf32>
    %43 = vector.multi_reduction <add>, %42, %cst_9 [2] : vector<4x16x16xf32> to vector<4x16xf32>
    %44 = vector.shape_cast %43 : vector<4x16xf32> to vector<4x16x1xf32>
    %45 = tpu.reciprocal %44 : vector<4x16x1xf32> -> vector<4x16x1xf32>
    %46 = vector.broadcast %45 : vector<4x16x1xf32> to vector<4x16x16xf32>
    %47 = arith.mulf %42, %46 : vector<4x16x16xf32>
    %48 = arith.truncf %47 : vector<4x16x16xf32> to vector<4x16x16xbf16>
    %c0_10 = arith.constant 0 : index
    %c0_11 = arith.constant 0 : index
    %c0_12 = arith.constant 0 : index
    %c0_13 = arith.constant 0 : index
    %49 = vector.load %arg7[%c0_10, %c0_11, %c0_12, %c0_13] : memref<1x4x16x16xbf16, #tpu.memory_space<vmem>>, vector<1x4x16x16xbf16>
    %50 = vector.shape_cast %49 : vector<1x4x16x16xbf16> to vector<4x16x16xbf16>
    %51 = vector.shape_cast %48 : vector<4x16x16xbf16> to vector<1x4x16x16xbf16>
    tpu.vector_store %arg7[%c0_10, %c0_11, %c0_12, %c0_13], %51 {strides = array<i32>} : memref<1x4x16x16xbf16, #tpu.memory_space<vmem>>, vector<1x4x16x16xbf16>,
    %52 = arith.truncf %47 : vector<4x16x16xf32> to vector<4x16x16xbf16>
    %cst_14 = arith.constant dense<0.000000e+00> : vector<4x16x8xf32>
    %53 = tpu.matmul %52, %34, %cst_14 {dimension_numbers = #tpu.dot_dimension_numbers<[2], [1], [1], [2], [0, 0, 0, 1, 1, 2], [0], [0]>} : vector<4x16x16xbf16>, vector<4x16x8xbf16>, vector<4x16x8xf32> -> vector<4x16x8xf32>
    %54 = vector.extract_strided_slice %53 {offsets = [0, 0, 0], sizes = [1, 16, 8], strides = [1, 1, 1]} : vector<4x16x8xf32> to vector<1x16x8xf32>
    %55 = vector.shape_cast %54 : vector<1x16x8xf32> to vector<16x8xf32>
    %56 = vector.extract_strided_slice %53 {offsets = [1, 0, 0], sizes = [1, 16, 8], strides = [1, 1, 1]} : vector<4x16x8xf32> to vector<1x16x8xf32>
    %57 = vector.shape_cast %56 : vector<1x16x8xf32> to vector<16x8xf32>
    %58 = vector.extract_strided_slice %53 {offsets = [2, 0, 0], sizes = [1, 16, 8], strides = [1, 1, 1]} : vector<4x16x8xf32> to vector<1x16x8xf32>
    %59 = vector.shape_cast %58 : vector<1x16x8xf32> to vector<16x8xf32>
    %60 = vector.extract_strided_slice %53 {offsets = [3, 0, 0], sizes = [1, 16, 8], strides = [1, 1, 1]} : vector<4x16x8xf32> to vector<1x16x8xf32>
    %61 = vector.shape_cast %60 : vector<1x16x8xf32> to vector<16x8xf32>
    %62 = tpu.concatenate %55, %57, %59, %61 in 1 : vector<16x8xf32>, vector<16x8xf32>, vector<16x8xf32>, vector<16x8xf32> -> vector<16x32xf32>
    %63 = arith.truncf %62 : vector<16x32xf32> to vector<16x32xbf16>
    %c0_15 = arith.constant 0 : index
    %c0_16 = arith.constant 0 : index
    %64 = vector.load %arg4[%c0_15, %c0_16] : memref<32x32xbf16, #tpu.memory_space<vmem>>, vector<32x32xbf16>
    %cst_17 = arith.constant dense<0.000000e+00> : vector<16x32xf32>
    %65 = tpu.matmul %63, %64, %cst_17 {dimension_numbers = #tpu.dot_dimension_numbers<[1], [0], [0], [1], [0, 0, 1, 1], [], []>} : vector<16x32xbf16>, vector<32x32xbf16>, vector<16x32xf32> -> vector<16x32xf32>
    %c0_18 = arith.constant 0 : index
    %c0_19 = arith.constant 0 : index
    %66 = vector.load %arg5[%c0_18, %c0_19] : memref<1x32xf32, #tpu.memory_space<vmem>>, vector<1x32xf32>
    %67 = vector.broadcast %66 : vector<1x32xf32> to vector<16x32xf32>
    %68 = arith.addf %65, %67 : vector<16x32xf32>
    %c0_20 = arith.constant 0 : index
    %c0_21 = arith.constant 0 : index
    %c0_22 = arith.constant 0 : index
    %69 = vector.load %arg6[%c0_20, %c0_21, %c0_22] : memref<1x16x32xf32, #tpu.memory_space<vmem>>, vector<1x16x32xf32>
    %70 = vector.shape_cast %69 : vector<1x16x32xf32> to vector<16x32xf32>
    %71 = vector.shape_cast %68 : vector<16x32xf32> to vector<1x16x32xf32>
    tpu.vector_store %arg6[%c0_20, %c0_21, %c0_22], %71 {strides = array<i32>} : memref<1x16x32xf32, #tpu.memory_space<vmem>>, vector<1x16x32xf32>,
    return
  }
  func.func @transform_0(%arg0: i32) -> (i32, i32, i32) {
    %c0_i32 = arith.constant 0 : i32
    %c0_i32_0 = arith.constant 0 : i32
    %c0_i32_1 = arith.constant 0 : i32
    return %arg0, %c0_i32, %c0_i32_0 : i32, i32, i32
  }
  func.func @transform_1(%arg0: i32) -> (i32, i32) {
    %c0_i32 = arith.constant 0 : i32
    %c0_i32_0 = arith.constant 0 : i32
    %c0_i32_1 = arith.constant 0 : i32
    return %c0_i32, %c0_i32_0 : i32, i32
  }
  func.func @transform_2(%arg0: i32) -> (i32, i32) {
    %c0_i32 = arith.constant 0 : i32
    %c0_i32_0 = arith.constant 0 : i32
    %c0_i32_1 = arith.constant 0 : i32
    return %c0_i32, %c0_i32_0 : i32, i32
  }
  func.func @transform_3(%arg0: i32) -> (i32, i32) {
    %c0_i32 = arith.constant 0 : i32
    %c0_i32_0 = arith.constant 0 : i32
    %c0_i32_1 = arith.constant 0 : i32
    return %c0_i32, %c0_i32_0 : i32, i32
  }
  func.func @transform_4(%arg0: i32) -> (i32, i32) {
    %c0_i32 = arith.constant 0 : i32
    %c0_i32_0 = arith.constant 0 : i32
    %c0_i32_1 = arith.constant 0 : i32
    return %c0_i32, %c0_i32_0 : i32, i32
  }
  func.func @transform_5(%arg0: i32) -> (i32, i32, i32) {
    %c0_i32 = arith.constant 0 : i32
    %c0_i32_0 = arith.constant 0 : i32
    %c0_i32_1 = arith.constant 0 : i32
    return %arg0, %c0_i32, %c0_i32_0 : i32, i32, i32
  }
  func.func @transform_6(%arg0: i32) -> (i32, i32, i32, i32) {
    %c0_i32 = arith.constant 0 : i32
    %c0_i32_0 = arith.constant 0 : i32
    %c0_i32_1 = arith.constant 0 : i32
    %c0_i32_2 = arith.constant 0 : i32
    return %arg0, %c0_i32, %c0_i32_0, %c0_i32_1 : i32, i32, i32, i32
  }
}

</mosaic_0001>

<llo_original>
// kernel: tpu_custom_call.1
$region0: #{tpu_custom_call.1}
  #allocation0 [shape = 'u32[]', space=smem, size = 0x4, offset = 0x4, fixed_abs, tag = 'smem constant byte address 0x4 - core index']
  #allocation1 [shape = 'u32[144,128]{1,0:T(1,128)}', space=vmem, size = 0x12000, scoped, tag = 'internal scratch']
  %s0 = inlined_call_operand.hbm [shape: bf16[2,16,32], index: 0, kind: input, shape index: {}]
  %s1 = inlined_call_operand.hbm [shape: bf16[32,96], index: 1, kind: input, shape index: {}]
  %s2 = inlined_call_operand.vmem [shape: f32[1,96], index: 2, kind: input, shape index: {}]
  %s3 = inlined_call_operand.hbm [shape: bf16[32,32], index: 3, kind: input, shape index: {}]
  %s4 = inlined_call_operand.vmem [shape: f32[1,32], index: 4, kind: input, shape index: {}]
  %s5 = inlined_call_operand.hbm [shape: f32[2,16,32], index: 5, kind: output, shape index: {0}]
  %s6 = inlined_call_operand.hbm [shape: bf16[2,4,16,16], index: 6, kind: output, shape index: {1}]
  %7 = xla_tuple %s5, %s6
  %s8 = sld [smem:[#allocation0]]
  $region73: #{tpu_custom_call.1} parent=0
    _
  %s10 = ssub.s32 1, %s8
  %s11 = scalar_select 0, %s10, %s8
  $region1: #{tpu_custom_call.1} parent=0
    #allocation2 [shape = 'u8[8192]{0}', space=vmem, size = 0x2000, scoped, tag = 'input window, operand 0']
    #allocation3 [shape = 's32[2]{0}', space=sflag, size = 0x8, scoped, tag = 'scoped memory for tpu_custom_call.1']
    #allocation4 [shape = 's32[2]{0}', space=sflag, size = 0x8, scoped, tag = 'scoped memory for tpu_custom_call.1']
    #allocation5 [shape = 'u8[8192]{0}', space=vmem, size = 0x2000, scoped, tag = 'input window, operand 1, single buffered']
    #allocation6 [shape = 's32[1]{0}', space=sflag, size = 0x4, scoped, tag = 'scoped memory for tpu_custom_call.1']
    #allocation7 [shape = 'u8[8192]{0}', space=vmem, size = 0x2000, scoped, tag = 'input window, operand 3, single buffered']
    #allocation8 [shape = 'u8[16384]{0}', space=vmem, size = 0x4000, scoped, tag = 'output window, operand 0']
    #allocation9 [shape = 'u8[32768]{0}', space=vmem, size = 0x8000, scoped, tag = 'output window, operand 1']
    #allocation10 [shape = 's32[2]{0}', space=sflag, size = 0x8, scoped, tag = 'scoped memory for tpu_custom_call.1']
    %12 = vsyncpa [#allocation3], 0
    %s13 = scalar_lea.sflag [#allocation3], 1
    %14 = vsyncpa %s13, 0
    %15 = vsyncpa [#allocation6], 0
    %16 = vsyncpa [#allocation4], 0
    %s17 = scalar_lea.sflag [#allocation4], 1
    %18 = vsyncpa %s17, 0
    %19 = vsyncpa [#allocation10], 0
    %s20 = scalar_lea.sflag [#allocation10], 1
    %21 = vsyncpa %s20, 0
    loop: start=0, step=1, limit=4
    $region2: #{tpu_custom_call.1} parent=1 // loop_pre_header
      _
    $region3: #{tpu_custom_call.1} parent=1 // loop_header
      %s23 = sphi 0, %s27
      %p24 = scmp.ge.s32.totalorder %s23, 4
      %s33 = sphi 0, %s35
      %s36 = sphi 0, %s33
      %s37 = sphi 0, %s36
      %s53 = sphi 0, %s37
      %s57 = sphi 0, %s57
      %s59 = sphi 0, %s57
      %s60 = sphi 0, %s59
      %s74 = sphi 0, %s60
      %s78 = sphi 0, %s78
      %s80 = sphi 0, %s78
      %s81 = sphi 0, %s80
      %s95 = sphi 0, %s81
      %s99 = sphi 0, %s99
      %s101 = sphi 0, %s99
      %s102 = sphi 0, %s101
      %s116 = sphi 0, %s102
      %s120 = sphi 0, %s120
      %s122 = sphi 0, %s120
      %s123 = sphi 0, %s122
      %s137 = sphi 0, %s123
      %s143 = sphi 0, %s145
      %s146 = sphi 0, %s143
      %s147 = sphi 0, %s146
      %s163 = sphi 0, %s147
      %s169 = sphi 0, %s171
      %s172 = sphi 0, %s169
      %s173 = sphi 0, %s172
      %s189 = sphi 0, %s173
    $region4: #{tpu_custom_call.1} parent=1 // loop_header_branch
      %26 = sbr.rel (%p24) target = $region8
    $region5: #{tpu_custom_call.1} parent=1 // loop_body
      %s28 = ssub.s32 %s23, 1
      %s29 = ssub.s32 %s23, 2
      %s30 = sadd.s32 %s23, 1
      %s31 = ssub.s32 %s23, %s30
      %p32 = scmp.eq.s32.totalorder %s31, 0
      %s34 = sadd.s32 %s33, 1
      %s35 = scalar_select %p32, %s33, %s34
      %p38 = pneg %p32
      %p39 = scmp.eq.s32.totalorder %s23, 1
      %p40 = por %p38, %p39
      %p41 = scmp.ne.s32.totalorder %s33, %s36
      %p42 = scmp.eq.s32.totalorder %s23, 0
      %p43 = por %p41, %p42
      %p44 = scmp.ne.s32.totalorder %s33, %s36
      %p45 = scmp.eq.s32.totalorder %s28, 1
      %p46 = por %p44, %p45
      %p47 = scmp.ne.s32.totalorder %s36, %s37
      %p48 = scmp.eq.s32.totalorder %s28, 0
      %p49 = por %p47, %p48
      %p50 = scmp.ne.s32.totalorder %s36, %s37
      %p51 = scmp.eq.s32.totalorder %s29, 1
      %p52 = por %p50, %p51
      %p54 = scmp.ne.s32.totalorder %s37, %s53
      %p55 = scmp.eq.s32.totalorder %s29, 0
      %p56 = por %p54, %p55
      %s58 = sadd.s32 %s57, 1
      %p61 = scmp.eq.s32.totalorder %s23, 1
      %p62 = scmp.ne.s32.totalorder %s57, %s59
      %p63 = scmp.eq.s32.totalorder %s23, 0
      %p64 = por %p62, %p63
      %p65 = scmp.ne.s32.totalorder %s57, %s59
      %p66 = scmp.eq.s32.totalorder %s28, 1
      %p67 = por %p65, %p66
      %p68 = scmp.ne.s32.totalorder %s59, %s60
      %p69 = scmp.eq.s32.totalorder %s28, 0
      %p70 = por %p68, %p69
      %p71 = scmp.ne.s32.totalorder %s59, %s60
      %p72 = scmp.eq.s32.totalorder %s29, 1
      %p73 = por %p71, %p72
      %p75 = scmp.ne.s32.totalorder %s60, %s74
      %p76 = scmp.eq.s32.totalorder %s29, 0
      %p77 = por %p75, %p76
      %s79 = sadd.s32 %s78, 1
      %p82 = scmp.eq.s32.totalorder %s23, 1
      %p83 = scmp.ne.s32.totalorder %s78, %s80
      %p84 = scmp.eq.s32.totalorder %s23, 0
      %p85 = por %p83, %p84
      %p86 = scmp.ne.s32.totalorder %s78, %s80
      %p87 = scmp.eq.s32.totalorder %s28, 1
      %p88 = por %p86, %p87
      %p89 = scmp.ne.s32.totalorder %s80, %s81
      %p90 = scmp.eq.s32.totalorder %s28, 0
      %p91 = por %p89, %p90
      %p92 = scmp.ne.s32.totalorder %s80, %s81
      %p93 = scmp.eq.s32.totalorder %s29, 1
      %p94 = por %p92, %p93
      %p96 = scmp.ne.s32.totalorder %s81, %s95
      %p97 = scmp.eq.s32.totalorder %s29, 0
      %p98 = por %p96, %p97
      %s100 = sadd.s32 %s99, 1
      %p103 = scmp.eq.s32.totalorder %s23, 1
      %p104 = scmp.ne.s32.totalorder %s99, %s101
      %p105 = scmp.eq.s32.totalorder %s23, 0
      %p106 = por %p104, %p105
      %p107 = scmp.ne.s32.totalorder %s99, %s101
      %p108 = scmp.eq.s32.totalorder %s28, 1
      %p109 = por %p107, %p108
      %p110 = scmp.ne.s32.totalorder %s101, %s102
      %p111 = scmp.eq.s32.totalorder %s28, 0
      %p112 = por %p110, %p111
      %p113 = scmp.ne.s32.totalorder %s101, %s102
      %p114 = scmp.eq.s32.totalorder %s29, 1
      %p115 = por %p113, %p114
      %p117 = scmp.ne.s32.totalorder %s102, %s116
      %p118 = scmp.eq.s32.totalorder %s29, 0
      %p119 = por %p117, %p118
      %s121 = sadd.s32 %s120, 1
      %p124 = scmp.eq.s32.totalorder %s23, 1
      %p125 = scmp.ne.s32.totalorder %s120, %s122
      %p126 = scmp.eq.s32.totalorder %s23, 0
      %p127 = por %p125, %p126
      %p128 = scmp.ne.s32.totalorder %s120, %s122
      %p129 = scmp.eq.s32.totalorder %s28, 1
      %p130 = por %p128, %p129
      %p131 = scmp.ne.s32.totalorder %s122, %s123
      %p132 = scmp.eq.s32.totalorder %s28, 0
      %p133 = por %p131, %p132
      %p134 = scmp.ne.s32.totalorder %s122, %s123
      %p135 = scmp.eq.s32.totalorder %s29, 1
      %p136 = por %p134, %p135
      %p138 = scmp.ne.s32.totalorder %s123, %s137
      %p139 = scmp.eq.s32.totalorder %s29, 0
      %p140 = por %p138, %p139
      %s141 = ssub.s32 %s23, %s30
      %p142 = scmp.eq.s32.totalorder %s141, 0
      %s144 = sadd.s32 %s143, 1
      %s145 = scalar_select %p142, %s143, %s144
      %p148 = pneg %p142
      %p149 = scmp.eq.s32.totalorder %s23, 1
      %p150 = por %p148, %p149
      %p151 = scmp.ne.s32.totalorder %s143, %s146
      %p152 = scmp.eq.s32.totalorder %s23, 0
      %p153 = por %p151, %p152
      %p154 = scmp.ne.s32.totalorder %s143, %s146
      %p155 = scmp.eq.s32.totalorder %s28, 1
      %p156 = por %p154, %p155
      %p157 = scmp.ne.s32.totalorder %s146, %s147
      %p158 = scmp.eq.s32.totalorder %s28, 0
      %p159 = por %p157, %p158
      %p160 = scmp.ne.s32.totalorder %s146, %s147
      %p161 = scmp.eq.s32.totalorder %s29, 1
      %p162 = por %p160, %p161
      %p164 = scmp.ne.s32.totalorder %s147, %s163
      %p165 = scmp.eq.s32.totalorder %s29, 0
      %p166 = por %p164, %p165
      %s167 = ssub.s32 %s23, %s30
      %p168 = scmp.eq.s32.totalorder %s167, 0
      %s170 = sadd.s32 %s169, 1
      %s171 = scalar_select %p168, %s169, %s170
      %p174 = pneg %p168
      %p175 = scmp.eq.s32.totalorder %s23, 1
      %p176 = por %p174, %p175
      %p177 = scmp.ne.s32.totalorder %s169, %s172
      %p178 = scmp.eq.s32.totalorder %s23, 0
      %p179 = por %p177, %p178
      %p180 = scmp.ne.s32.totalorder %s169, %s172
      %p181 = scmp.eq.s32.totalorder %s28, 1
      %p182 = por %p180, %p181
      %p183 = scmp.ne.s32.totalorder %s172, %s173
      %p184 = scmp.eq.s32.totalorder %s28, 0
      %p185 = por %p183, %p184
      %p186 = scmp.ne.s32.totalorder %s172, %s173
      %p187 = scmp.eq.s32.totalorder %s29, 1
      %p188 = por %p186, %p187
      %p190 = scmp.ne.s32.totalorder %s173, %s189
      %p191 = scmp.eq.s32.totalorder %s29, 0
      %p192 = por %p190, %p191
      %p193 = scmp.le.s32.totalorder 1, %s23
      %p194 = scmp.lt.s32.totalorder %s23, 3
      %p195 = pnand %p193, %p194
      %p196 = pneg %p195
      // Predicated region
      $region9: #{tpu_custom_call.1} parent=5 // pred_check
        _
      $region10: #{tpu_custom_call.1} parent=5 // pred_check_branch
        %198 = sbr.rel (%p195) target = $region12
      $region11: #{tpu_custom_call.1} parent=5 // pred_region
        %s199 = ssub.s32 %s23, 1
        // Predicated region
        $region13: #{tpu_custom_call.1} parent=11 // pred_check
          %p200 = pneg %p70
        $region14: #{tpu_custom_call.1} parent=11 // pred_check_branch
          %202 = sbr.rel (%p200) target = $region16
        $region15: #{tpu_custom_call.1} parent=11 // pred_region
          %s204 = ssub.s32 256, 256
          %205 = vsyncadd [#allocation6], %s204
          %s206 = sshll.u32 [#allocation5], 4
          %s207 = int_to_ptr.vmem [resolvable:$true] %s206
          %212 = dma.hbm_to_vmem [thread:$0]  %s1, 256, %s207, [#allocation6], 64, 64, 4
        $region16: #{tpu_custom_call.1} parent=11 // pred_fallthru
          _
        // Predicated region
        $region17: #{tpu_custom_call.1} parent=11 // pred_check
          %p213 = pneg %p91
        $region18: #{tpu_custom_call.1} parent=11 // pred_check_branch
          %215 = sbr.rel (%p213) target = $region20
        $region19: #{tpu_custom_call.1} parent=11 // pred_region
          _
        $region20: #{tpu_custom_call.1} parent=11 // pred_fallthru
          _
        // Predicated region
        $region21: #{tpu_custom_call.1} parent=11 // pred_check
          %p216 = pneg %p112
        $region22: #{tpu_custom_call.1} parent=11 // pred_check_branch
          %218 = sbr.rel (%p216) target = $region24
        $region23: #{tpu_custom_call.1} parent=11 // pred_region
          %s220 = ssub.s32 256, 256
          %221 = vsyncadd [#allocation6], %s220
          %s222 = sshll.u32 [#allocation7], 4
          %s223 = int_to_ptr.vmem [resolvable:$true] %s222
          %228 = dma.hbm_to_vmem [thread:$0]  %s3, 256, %s223, [#allocation6], 64, 64, 4
        $region24: #{tpu_custom_call.1} parent=11 // pred_fallthru
          _
        // Predicated region
        $region25: #{tpu_custom_call.1} parent=11 // pred_check
          %p229 = pneg %p133
        $region26: #{tpu_custom_call.1} parent=11 // pred_check_branch
          %231 = sbr.rel (%p229) target = $region28
        $region27: #{tpu_custom_call.1} parent=11 // pred_region
          _
        $region28: #{tpu_custom_call.1} parent=11 // pred_fallthru
          _
      $region12: #{tpu_custom_call.1} parent=5 // pred_fallthru
        _
      %p232 = scmp.lt.s32.totalorder %s23, 2
      // Predicated region
      $region29: #{tpu_custom_call.1} parent=5 // pred_check
        %p233 = pneg %p232
      $region30: #{tpu_custom_call.1} parent=5 // pred_check_branch
        %235 = sbr.rel (%p233) target = $region32
      $region31: #{tpu_custom_call.1} parent=5 // pred_region
        // Predicated region
        $region33: #{tpu_custom_call.1} parent=31 // pred_check
          %p236 = pneg %p43
        $region34: #{tpu_custom_call.1} parent=31 // pred_check_branch
          %238 = sbr.rel (%p236) target = $region36
        $region35: #{tpu_custom_call.1} parent=31 // pred_region
          %s239 = sand.u32 %s33, 1
          %s240 = scalar_lea.sflag [#allocation3], %s239
          %s241 = sand.u32 %s33, 1
          %s242 = smul.addr %s241, 8
          %s243 = scalar_lea.vmem [#allocation2], %s242
          %s245 = ssub.s32 128, 128
          %246 = vsyncadd %s240, %s245
          %s247 = smul.addr %s23, 2
          %s248 = smul.addr %s247, 64
          %s249 = scalar_lea.hbm %s0, %s248
          %s250 = sshll.u32 %s243, 4
          %s251 = int_to_ptr.vmem [resolvable:$true] %s250
          %256 = dma.hbm_to_vmem [thread:$0]  %s249, 128, %s251, %s240, 64, 64, 4
        $region36: #{tpu_custom_call.1} parent=31 // pred_fallthru
          _
      $region32: #{tpu_custom_call.1} parent=5 // pred_fallthru
        _
      %p257 = scmp.le.s32.totalorder 1, %s23
      %p258 = scmp.lt.s32.totalorder %s23, 3
      %p259 = pnand %p257, %p258
      %p260 = pneg %p259
      // Predicated region
      $region37: #{tpu_custom_call.1} parent=5 // pred_check
        _
      $region38: #{tpu_custom_call.1} parent=5 // pred_check_branch
        %262 = sbr.rel (%p259) target = $region40
      $region39: #{tpu_custom_call.1} parent=5 // pred_region
        %s263 = ssub.s32 %s23, 1
        %s264 = sand.u32 %s36, 1
        %s265 = scalar_lea.sflag [#allocation3], %s264
        %s266 = sand.u32 %s36, 1
        %s267 = smul.addr %s266, 8
        %s268 = scalar_lea.vmem [#allocation2], %s267
        // Predicated region
        $region41: #{tpu_custom_call.1} parent=39 // pred_check
          %p269 = pneg %p49
        $region42: #{tpu_custom_call.1} parent=39 // pred_check_branch
          %271 = sbr.rel (%p269) target = $region44
        $region43: #{tpu_custom_call.1} parent=39 // pred_region
          %272 = dma.done %s265, 128
        $region44: #{tpu_custom_call.1} parent=39 // pred_fallthru
          _
        // Predicated region
        $region45: #{tpu_custom_call.1} parent=39 // pred_check
          %p273 = pneg %p70
        $region46: #{tpu_custom_call.1} parent=39 // pred_check_branch
          %275 = sbr.rel (%p273) target = $region48
        $region47: #{tpu_custom_call.1} parent=39 // pred_region
          %276 = dma.done [#allocation6], 256
        $region48: #{tpu_custom_call.1} parent=39 // pred_fallthru
          _
        // Predicated region
        $region49: #{tpu_custom_call.1} parent=39 // pred_check
          %p277 = pneg %p112
        $region50: #{tpu_custom_call.1} parent=39 // pred_check_branch
          %279 = sbr.rel (%p277) target = $region52
        $region51: #{tpu_custom_call.1} parent=39 // pred_region
          %280 = dma.done [#allocation6], 256
        $region52: #{tpu_custom_call.1} parent=39 // pred_fallthru
          _
        %s281 = sand.u32 %s36, 1
        %s282 = scalar_lea.sflag [#allocation3], %s281
        %s283 = sand.u32 %s36, 1
        %s284 = smul.addr %s283, 8
        %s285 = scalar_lea.vmem [#allocation2], %s284
        %p286 = pneg %p49
        %p287 = pneg %p46
        %p288 = pneg %p70
        %p289 = pneg %p67
        %p290 = pneg %p91
        %p291 = pneg %p88
        %p292 = pneg %p112
        %p293 = pneg %p109
        %p294 = pneg %p133
        %p295 = pneg %p130
        %p296 = pneg %p159
        %p297 = pneg %p156
        %s298 = sand.u32 %s146, 1
        %s299 = scalar_lea.sflag [#allocation4], %s298
        %s300 = sand.u32 %s146, 1
        %s301 = smul.addr %s300, 16
        %s302 = scalar_lea.vmem [#allocation8], %s301
        %p303 = pneg %p185
        %p304 = pneg %p182
        %s305 = sand.u32 %s172, 1
        %s306 = scalar_lea.sflag [#allocation10], %s305
        %s307 = sand.u32 %s172, 1
        %s308 = smul.addr %s307, 32
        %s309 = scalar_lea.vmem [#allocation9], %s308
        %v311 = vld [vmem:[%s268] sm:$0xf]
        %v312 = vld [vmem:[%s268 + $0x4] sm:$0xf]
        %v313 = vld [vmem:[#allocation5] sm:$0xf]
        %v314 = vld [vmem:[#allocation5 + $0x4] sm:$0xf]
        %v315 = vld [vmem:[#allocation5 + $0x8] sm:$0xf]
        %v316 = vld [vmem:[#allocation5 + $0xc] sm:$0xf]
        %v317 = vld [vmem:[%s2] sm:$0x1]
        %v319 = vlaneseq
        %v320 = vshrl.u32 %v319, 7
        %v321 = vsub.s32 0, %v320
        %v322 = vrot.slane %v317, %v321
        %v326 = vunpack.c.l.b16 %v311
        %v327 = vunpack.c.l.b16 %v312
        %v328 = vpack.c.b16 %v327, %v326
        %v333 = vunpack.c.l.b16 %v313
        %v334 = vunpack.c.l.b16 %v314
        %v335 = vunpack.c.l.b16 %v315
        %v336 = vunpack.c.l.b16 %v316
        %v337 = vpack.c.b16 %v334, %v333
        %v338 = vpack.c.b16 %v336, %v335
        %vm341 = vcmask 261120
        %v343 = vsel %vm341, %v328, 0
        %345 = vmatprep.subr.bf16.mxu0 0
        %346 = vmatpush1.bf16.msra.mxu0 %v337
        %347 = vmatprep.subr.bf16.mxu0 0
        %348 = vmatpush1.bf16.msra.mxu0 %v338
        %349 = vmatprep.subr.bf16.mxu0 0
        %350 = vmatpush1.bf16.msra.mxu0 0
        %351 = vmatprep.subr.bf16.mxu0 0
        %352 = vmatpush1.bf16.msra.mxu0 0
        %353 = vmatprep.subr.bf16.mxu0 0
        %354 = vmatpush1.bf16.msra.mxu0 0
        %355 = vmatprep.subr.bf16.mxu0 0
        %356 = vmatpush1.bf16.msra.mxu0 0
        %357 = vmatprep.subr.bf16.mxu0 0
        %358 = vmatpush1.bf16.msra.mxu0 0
        %359 = vmatprep.subr.bf16.mxu0 0
        %360 = vmatpush1.bf16.msra.mxu0 0
        %361 = vmatprep.subr.bf16.mxu0 0
        %362 = vmatpush1.bf16.msra.mxu0 0
        %363 = vmatprep.subr.bf16.mxu0 0
        %364 = vmatpush1.bf16.msra.mxu0 0
        %365 = vmatprep.subr.bf16.mxu0 0
        %366 = vmatpush1.bf16.msra.mxu0 0
        %367 = vmatprep.subr.bf16.mxu0 0
        %368 = vmatpush1.bf16.msra.mxu0 0
        %369 = vmatprep.subr.bf16.mxu0 0
        %370 = vmatpush1.bf16.msra.mxu0 0
        %371 = vmatprep.subr.bf16.mxu0 0
        %372 = vmatpush1.bf16.msra.mxu0 0
        %373 = vmatprep.subr.bf16.mxu0 0
        %374 = vmatpush1.bf16.msra.mxu0 0
        %375 = vmatprep.subr.bf16.mxu0 0
        %376 = vmatpush1.bf16.msra.mxu0 0
        %377 = vmatprep.mubr.bf16.mxu0 0
        %378 = vmatmul.mubr.bf16.gmra.mrb[0].mxu0 %v343
        %v379 = vpop.f32.mrb[0].mxu0
        %v380 = vadd.f32 %v322, %v379
        %v381 = vpop.f32.mrb[0].mxu0
        %v382 = vpop.f32.mrb[0].mxu0
        %v383 = vadd.f32 %v322, %v382
        %v384 = vpop.f32.mrb[0].mxu0
        %385 = vdwg.mxu0
        %v386 = vpack.c.bf16 %v383, %v380
        %388 = vrot.lane.b32.xlu0 %v386, 120
        %v389 = vpop.permute.xlu0 %388
        %390 = vrot.lane.b32.xlu0 %v386, 112
        %v391 = vpop.permute.xlu0 %390
        %392 = vrot.lane.b32.xlu0 %v386, 104
        %v393 = vpop.permute.xlu0 %392
        %394 = vrot.lane.b32.xlu0 %v386, 96
        %v395 = vpop.permute.xlu0 %394
        %vm396 = vcmask 64512
        %v398 = vsel %vm396, %v386, 0
        %v401 = vsel %vm396, %v395, 0
        %403 = vmatprep.subr.bf16.mxu0 0
        %404 = vmatpush1.bf16.xpose.msra.mxu0 %v401
        %405 = vmatprep.subr.bf16.mxu0 0
        %406 = vmatpush1.bf16.xpose.msra.mxu0 0
        %407 = vmatprep.subr.bf16.mxu0 0
        %408 = vmatpush1.bf16.xpose.msra.mxu0 0
        %409 = vmatprep.subr.bf16.mxu0 0
        %410 = vmatpush1.bf16.xpose.msra.mxu0 0
        %411 = vmatprep.subr.bf16.mxu0 0
        %412 = vmatpush1.bf16.xpose.msra.mxu0 0
        %413 = vmatprep.subr.bf16.mxu0 0
        %414 = vmatpush1.bf16.xpose.msra.mxu0 0
        %415 = vmatprep.subr.bf16.mxu0 0
        %416 = vmatpush1.bf16.xpose.msra.mxu0 0
        %417 = vmatprep.subr.bf16.mxu0 0
        %418 = vmatpush1.bf16.xpose.msra.mxu0 0
        %419 = vmatprep.subr.bf16.mxu0 0
        %420 = vmatpush1.bf16.xpose.msra.mxu0 0
        %421 = vmatprep.subr.bf16.mxu0 0
        %422 = vmatpush1.bf16.xpose.msra.mxu0 0
        %423 = vmatprep.subr.bf16.mxu0 0
        %424 = vmatpush1.bf16.xpose.msra.mxu0 0
        %425 = vmatprep.subr.bf16.mxu0 0
        %426 = vmatpush1.bf16.xpose.msra.mxu0 0
        %427 = vmatprep.subr.bf16.mxu0 0
        %428 = vmatpush1.bf16.xpose.msra.mxu0 0
        %429 = vmatprep.subr.bf16.mxu0 0
        %430 = vmatpush1.bf16.xpose.msra.mxu0 0
        %431 = vmatprep.subr.bf16.mxu0 0
        %432 = vmatpush1.bf16.xpose.msra.mxu0 0
        %433 = vmatprep.subr.bf16.mxu0 0
        %434 = vmatpush1.bf16.xpose.msra.mxu0 0
        %435 = vmatprep.mubr.bf16.mxu0 0
        %436 = vmatmul.mubr.bf16.gmra.mrb[0].mxu0 %v398
        %v437 = vpop.f32.mrb[0].mxu0
        %v438 = vadd.f32 0.0, %v437
        %v439 = vpop.f32.mrb[0].mxu0
        %v440 = vpop.f32.mrb[0].mxu0
        %v441 = vadd.f32 0.0, %v440
        %v442 = vpop.f32.mrb[0].mxu0
        %443 = vdwg.mxu0
        %444 = vrot.lane.b32.xlu0 %v389, 96
        %v445 = vpop.permute.xlu0 %444
        %v447 = vsel %vm396, %v389, 0
        %v450 = vsel %vm396, %v445, 0
        %452 = vmatprep.subr.bf16.mxu0 0
        %453 = vmatpush1.bf16.xpose.msra.mxu0 %v450
        %454 = vmatprep.subr.bf16.mxu0 0
        %455 = vmatpush1.bf16.xpose.msra.mxu0 0
        %456 = vmatprep.subr.bf16.mxu0 0
        %457 = vmatpush1.bf16.xpose.msra.mxu0 0
        %458 = vmatprep.subr.bf16.mxu0 0
        %459 = vmatpush1.bf16.xpose.msra.mxu0 0
        %460 = vmatprep.subr.bf16.mxu0 0
        %461 = vmatpush1.bf16.xpose.msra.mxu0 0
        %462 = vmatprep.subr.bf16.mxu0 0
        %463 = vmatpush1.bf16.xpose.msra.mxu0 0
        %464 = vmatprep.subr.bf16.mxu0 0
        %465 = vmatpush1.bf16.xpose.msra.mxu0 0
        %466 = vmatprep.subr.bf16.mxu0 0
        %467 = vmatpush1.bf16.xpose.msra.mxu0 0
        %468 = vmatprep.subr.bf16.mxu0 0
        %469 = vmatpush1.bf16.xpose.msra.mxu0 0
        %470 = vmatprep.subr.bf16.mxu0 0
        %471 = vmatpush1.bf16.xpose.msra.mxu0 0
        %472 = vmatprep.subr.bf16.mxu0 0
        %473 = vmatpush1.bf16.xpose.msra.mxu0 0
        %474 = vmatprep.subr.bf16.mxu0 0
        %475 = vmatpush1.bf16.xpose.msra.mxu0 0
        %476 = vmatprep.subr.bf16.mxu0 0
        %477 = vmatpush1.bf16.xpose.msra.mxu0 0
        %478 = vmatprep.subr.bf16.mxu0 0
        %479 = vmatpush1.bf16.xpose.msra.mxu0 0
        %480 = vmatprep.subr.bf16.mxu0 0
        %481 = vmatpush1.bf16.xpose.msra.mxu0 0
        %482 = vmatprep.subr.bf16.mxu0 0
        %483 = vmatpush1.bf16.xpose.msra.mxu0 0
        %484 = vmatprep.mubr.bf16.mxu0 0
        %485 = vmatmul.mubr.bf16.gmra.mrb[0].mxu0 %v447
        %v486 = vpop.f32.mrb[0].mxu0
        %v487 = vadd.f32 0.0, %v486
        %v488 = vpop.f32.mrb[0].mxu0
        %v489 = vpop.f32.mrb[0].mxu0
        %v490 = vadd.f32 0.0, %v489
        %v491 = vpop.f32.mrb[0].mxu0
        %492 = vdwg.mxu0
        %493 = vrot.lane.b32.xlu0 %v391, 96
        %v494 = vpop.permute.xlu0 %493
        %v496 = vsel %vm396, %v391, 0
        %v499 = vsel %vm396, %v494, 0
        %501 = vmatprep.subr.bf16.mxu0 0
        %502 = vmatpush1.bf16.xpose.msra.mxu0 %v499
        %503 = vmatprep.subr.bf16.mxu0 0
        %504 = vmatpush1.bf16.xpose.msra.mxu0 0
        %505 = vmatprep.subr.bf16.mxu0 0
        %506 = vmatpush1.bf16.xpose.msra.mxu0 0
        %507 = vmatprep.subr.bf16.mxu0 0
        %508 = vmatpush1.bf16.xpose.msra.mxu0 0
        %509 = vmatprep.subr.bf16.mxu0 0
        %510 = vmatpush1.bf16.xpose.msra.mxu0 0
        %511 = vmatprep.subr.bf16.mxu0 0
        %512 = vmatpush1.bf16.xpose.msra.mxu0 0
        %513 = vmatprep.subr.bf16.mxu0 0
        %514 = vmatpush1.bf16.xpose.msra.mxu0 0
        %515 = vmatprep.subr.bf16.mxu0 0
        %516 = vmatpush1.bf16.xpose.msra.mxu0 0
        %517 = vmatprep.subr.bf16.mxu0 0
        %518 = vmatpush1.bf16.xpose.msra.mxu0 0
        %519 = vmatprep.subr.bf16.mxu0 0
        %520 = vmatpush1.bf16.xpose.msra.mxu0 0
        %521 = vmatprep.subr.bf16.mxu0 0
        %522 = vmatpush1.bf16.xpose.msra.mxu0 0
        %523 = vmatprep.subr.bf16.mxu0 0
        %524 = vmatpush1.bf16.xpose.msra.mxu0 0
        %525 = vmatprep.subr.bf16.mxu0 0
        %526 = vmatpush1.bf16.xpose.msra.mxu0 0
        %527 = vmatprep.subr.bf16.mxu0 0
        %528 = vmatpush1.bf16.xpose.msra.mxu0 0
        %529 = vmatprep.subr.bf16.mxu0 0
        %530 = vmatpush1.bf16.xpose.msra.mxu0 0
        %531 = vmatprep.subr.bf16.mxu0 0
        %532 = vmatpush1.bf16.xpose.msra.mxu0 0
        %533 = vmatprep.mubr.bf16.mxu0 0
        %534 = vmatmul.mubr.bf16.gmra.mrb[0].mxu0 %v496
        %v535 = vpop.f32.mrb[0].mxu0
        %v536 = vadd.f32 0.0, %v535
        %v537 = vpop.f32.mrb[0].mxu0
        %v538 = vpop.f32.mrb[0].mxu0
        %v539 = vadd.f32 0.0, %v538
        %v540 = vpop.f32.mrb[0].mxu0
        %541 = vdwg.mxu0
        %542 = vrot.lane.b32.xlu0 %v393, 96
        %v543 = vpop.permute.xlu0 %542
        %v545 = vsel %vm396, %v393, 0
        %v548 = vsel %vm396, %v543, 0
        %550 = vmatprep.subr.bf16.mxu0 0
        %551 = vmatpush1.bf16.xpose.msra.mxu0 %v548
        %552 = vmatprep.subr.bf16.mxu0 0
        %553 = vmatpush1.bf16.xpose.msra.mxu0 0
        %554 = vmatprep.subr.bf16.mxu0 0
        %555 = vmatpush1.bf16.xpose.msra.mxu0 0
        %556 = vmatprep.subr.bf16.mxu0 0
        %557 = vmatpush1.bf16.xpose.msra.mxu0 0
        %558 = vmatprep.subr.bf16.mxu0 0
        %559 = vmatpush1.bf16.xpose.msra.mxu0 0
        %560 = vmatprep.subr.bf16.mxu0 0
        %561 = vmatpush1.bf16.xpose.msra.mxu0 0
        %562 = vmatprep.subr.bf16.mxu0 0
        %563 = vmatpush1.bf16.xpose.msra.mxu0 0
        %564 = vmatprep.subr.bf16.mxu0 0
        %565 = vmatpush1.bf16.xpose.msra.mxu0 0
        %566 = vmatprep.subr.bf16.mxu0 0
        %567 = vmatpush1.bf16.xpose.msra.mxu0 0
        %568 = vmatprep.subr.bf16.mxu0 0
        %569 = vmatpush1.bf16.xpose.msra.mxu0 0
        %570 = vmatprep.subr.bf16.mxu0 0
        %571 = vmatpush1.bf16.xpose.msra.mxu0 0
        %572 = vmatprep.subr.bf16.mxu0 0
        %573 = vmatpush1.bf16.xpose.msra.mxu0 0
        %574 = vmatprep.subr.bf16.mxu0 0
        %575 = vmatpush1.bf16.xpose.msra.mxu0 0
        %576 = vmatprep.subr.bf16.mxu0 0
        %577 = vmatpush1.bf16.xpose.msra.mxu0 0
        %578 = vmatprep.subr.bf16.mxu0 0
        %579 = vmatpush1.bf16.xpose.msra.mxu0 0
        %580 = vmatprep.subr.bf16.mxu0 0
        %581 = vmatpush1.bf16.xpose.msra.mxu0 0
        %582 = vmatprep.mubr.bf16.mxu0 0
        %583 = vmatmul.mubr.bf16.gmra.mrb[0].mxu0 %v545
        %v584 = vpop.f32.mrb[0].mxu0
        %v585 = vadd.f32 0.0, %v584
        %v586 = vpop.f32.mrb[0].mxu0
        %v587 = vpop.f32.mrb[0].mxu0
        %v588 = vadd.f32 0.0, %v587
        %v589 = vpop.f32.mrb[0].mxu0
        %590 = vdwg.mxu0
        %v591 = vmul.f32 %v438, 0.35355338
        %v592 = vmul.f32 %v441, 0.35355338
        %v593 = vmul.f32 %v487, 0.35355338
        %v594 = vmul.f32 %v490, 0.35355338
        %v595 = vmul.f32 %v536, 0.35355338
        %v596 = vmul.f32 %v539, 0.35355338
        %v597 = vmul.f32 %v585, 0.35355338
        %v598 = vmul.f32 %v588, 0.35355338
        %vm599 = vcmask 130048
        %v600 = vsel %vm599, %v591, -inf
        %601 = vmax.xlane.f32.xlu0 %v600
        %v602 = vpop.xlane.xlu0 %601
        %v603 = vsel %vm599, %v592, -inf
        %604 = vmax.xlane.f32.xlu0 %v603
        %v605 = vpop.xlane.xlu0 %604
        %v606 = vsel %vm599, %v593, -inf
        %607 = vmax.xlane.f32.xlu0 %v606
        %v608 = vpop.xlane.xlu0 %607
        %v609 = vsel %vm599, %v594, -inf
        %610 = vmax.xlane.f32.xlu0 %v609
        %v611 = vpop.xlane.xlu0 %610
        %v612 = vsel %vm599, %v595, -inf
        %613 = vmax.xlane.f32.xlu0 %v612
        %v614 = vpop.xlane.xlu0 %613
        %v615 = vsel %vm599, %v596, -inf
        %616 = vmax.xlane.f32.xlu0 %v615
        %v617 = vpop.xlane.xlu0 %616
        %v618 = vsel %vm599, %v597, -inf
        %619 = vmax.xlane.f32.xlu0 %v618
        %v620 = vpop.xlane.xlu0 %619
        %v621 = vsel %vm599, %v598, -inf
        %622 = vmax.xlane.f32.xlu0 %v621
        %v623 = vpop.xlane.xlu0 %622
        %v624 = vsub.f32 %v591, %v602
        %v625 = vsub.f32 %v592, %v605
        %v626 = vsub.f32 %v593, %v608
        %v627 = vsub.f32 %v594, %v611
        %v628 = vsub.f32 %v595, %v614
        %v629 = vsub.f32 %v596, %v617
        %v630 = vsub.f32 %v597, %v620
        %v631 = vsub.f32 %v598, %v623
        %v632 = vmul.f32 %v624, 1.442695
        %v633 = vpow.pop %v632
        %v634 = vmul.f32 %v625, 1.442695
        %v635 = vpow.pop %v634
        %v636 = vmul.f32 %v626, 1.442695
        %v637 = vpow.pop %v636
        %v638 = vmul.f32 %v627, 1.442695
        %v639 = vpow.pop %v638
        %v640 = vmul.f32 %v628, 1.442695
        %v641 = vpow.pop %v640
        %v642 = vmul.f32 %v629, 1.442695
        %v643 = vpow.pop %v642
        %v644 = vmul.f32 %v630, 1.442695
        %v645 = vpow.pop %v644
        %v646 = vmul.f32 %v631, 1.442695
        %v647 = vpow.pop %v646
        %v648 = vsel %vm599, %v633, 0.0
        %649 = vadd.xlane.f32.xlu0 %v648
        %v650 = vpop.xlane.xlu0 %649
        %v651 = vsel %vm599, %v635, 0.0
        %652 = vadd.xlane.f32.xlu0 %v651
        %v653 = vpop.xlane.xlu0 %652
        %v654 = vsel %vm599, %v637, 0.0
        %655 = vadd.xlane.f32.xlu0 %v654
        %v656 = vpop.xlane.xlu0 %655
        %v657 = vsel %vm599, %v639, 0.0
        %658 = vadd.xlane.f32.xlu0 %v657
        %v659 = vpop.xlane.xlu0 %658
        %v660 = vsel %vm599, %v641, 0.0
        %661 = vadd.xlane.f32.xlu0 %v660
        %v662 = vpop.xlane.xlu0 %661
        %v663 = vsel %vm599, %v643, 0.0
        %664 = vadd.xlane.f32.xlu0 %v663
        %v665 = vpop.xlane.xlu0 %664
        %v666 = vsel %vm599, %v645, 0.0
        %667 = vadd.xlane.f32.xlu0 %v666
        %v668 = vpop.xlane.xlu0 %667
        %v669 = vsel %vm599, %v647, 0.0
        %670 = vadd.xlane.f32.xlu0 %v669
        %v671 = vpop.xlane.xlu0 %670
        %v672 = vrcp.pop %v650
        %v673 = vrcp.pop %v653
        %v674 = vrcp.pop %v656
        %v675 = vrcp.pop %v659
        %v676 = vrcp.pop %v662
        %v677 = vrcp.pop %v665
        %v678 = vrcp.pop %v668
        %v679 = vrcp.pop %v671
        %v680 = vmul.f32 %v633, %v672
        %v681 = vmul.f32 %v635, %v673
        %v682 = vmul.f32 %v637, %v674
        %v683 = vmul.f32 %v639, %v675
        %v684 = vmul.f32 %v641, %v676
        %v685 = vmul.f32 %v643, %v677
        %v686 = vmul.f32 %v645, %v678
        %v687 = vmul.f32 %v647, %v679
        %v688 = vpack.c.bf16 %v681, %v680
        %v689 = vpack.c.bf16 %v683, %v682
        %v690 = vpack.c.bf16 %v685, %v684
        %v691 = vpack.c.bf16 %v687, %v686
        %v696 = vunpack.c.l.b16 %v688
        %v697 = vunpack.c.h.b16 %v688
        %v698 = vunpack.c.l.b16 %v689
        %v699 = vunpack.c.h.b16 %v689
        %v700 = vunpack.c.l.b16 %v690
        %v701 = vunpack.c.h.b16 %v690
        %v702 = vunpack.c.l.b16 %v691
        %v703 = vunpack.c.h.b16 %v691
        %v704 = vpack.c.b16 %v696, %v696
        %v705 = vpack.c.b16 %v697, %v697
        %v706 = vpack.c.b16 %v698, %v698
        %v707 = vpack.c.b16 %v699, %v699
        %v708 = vpack.c.b16 %v700, %v700
        %v709 = vpack.c.b16 %v701, %v701
        %v710 = vpack.c.b16 %v702, %v702
        %v711 = vpack.c.b16 %v703, %v703
        %vm720 = vcmask 125952
        %721 = vst.msk [vmem:[%s309] sm:$0xf] %vm720, %v704
        %722 = vst.msk [vmem:[%s309 + $0x4] sm:$0xf] %vm720, %v705
        %723 = vst.msk [vmem:[%s309 + $0x8] sm:$0xf] %vm720, %v706
        %724 = vst.msk [vmem:[%s309 + $0xc] sm:$0xf] %vm720, %v707
        %725 = vst.msk [vmem:[%s309 + $0x10] sm:$0xf] %vm720, %v708
        %726 = vst.msk [vmem:[%s309 + $0x14] sm:$0xf] %vm720, %v709
        %727 = vst.msk [vmem:[%s309 + $0x18] sm:$0xf] %vm720, %v710
        %728 = vst.msk [vmem:[%s309 + $0x1c] sm:$0xf] %vm720, %v711
        %729 = vrot.lane.b32.xlu0 %v386, 64
        %v730 = vpop.permute.xlu0 %729
        %v733 = vsel %vm599, %v688, 0
        %735 = vmatprep.subr.bf16.mxu0 0
        %736 = vmatpush1.bf16.msra.mxu0 %v730
        %737 = vmatprep.subr.bf16.mxu0 0
        %738 = vmatpush1.bf16.msra.mxu0 0
        %739 = vmatprep.subr.bf16.mxu0 0
        %740 = vmatpush1.bf16.msra.mxu0 0
        %741 = vmatprep.subr.bf16.mxu0 0
        %742 = vmatpush1.bf16.msra.mxu0 0
        %743 = vmatprep.subr.bf16.mxu0 0
        %744 = vmatpush1.bf16.msra.mxu0 0
        %745 = vmatprep.subr.bf16.mxu0 0
        %746 = vmatpush1.bf16.msra.mxu0 0
        %747 = vmatprep.subr.bf16.mxu0 0
        %748 = vmatpush1.bf16.msra.mxu0 0
        %749 = vmatprep.subr.bf16.mxu0 0
        %750 = vmatpush1.bf16.msra.mxu0 0
        %751 = vmatprep.subr.bf16.mxu0 0
        %752 = vmatpush1.bf16.msra.mxu0 0
        %753 = vmatprep.subr.bf16.mxu0 0
        %754 = vmatpush1.bf16.msra.mxu0 0
        %755 = vmatprep.subr.bf16.mxu0 0
        %756 = vmatpush1.bf16.msra.mxu0 0
        %757 = vmatprep.subr.bf16.mxu0 0
        %758 = vmatpush1.bf16.msra.mxu0 0
        %759 = vmatprep.subr.bf16.mxu0 0
        %760 = vmatpush1.bf16.msra.mxu0 0
        %761 = vmatprep.subr.bf16.mxu0 0
        %762 = vmatpush1.bf16.msra.mxu0 0
        %763 = vmatprep.subr.bf16.mxu0 0
        %764 = vmatpush1.bf16.msra.mxu0 0
        %765 = vmatprep.subr.bf16.mxu0 0
        %766 = vmatpush1.bf16.msra.mxu0 0
        %767 = vmatprep.mubr.bf16.mxu0 0
        %768 = vmatmul.mubr.bf16.gmra.mrb[0].mxu0 %v733
        %v769 = vpop.f32.mrb[0].mxu0
        %v770 = vadd.f32 0.0, %v769
        %v771 = vpop.f32.mrb[0].mxu0
        %v772 = vpop.f32.mrb[0].mxu0
        %v773 = vadd.f32 0.0, %v772
        %v774 = vpop.f32.mrb[0].mxu0
        %775 = vdwg.mxu0
        %776 = vrot.lane.b32.xlu0 %v389, 64
        %v777 = vpop.permute.xlu0 %776
        %v780 = vsel %vm599, %v689, 0
        %782 = vmatprep.subr.bf16.mxu0 0
        %783 = vmatpush1.bf16.msra.mxu0 %v777
        %784 = vmatprep.subr.bf16.mxu0 0
        %785 = vmatpush1.bf16.msra.mxu0 0
        %786 = vmatprep.subr.bf16.mxu0 0
        %787 = vmatpush1.bf16.msra.mxu0 0
        %788 = vmatprep.subr.bf16.mxu0 0
        %789 = vmatpush1.bf16.msra.mxu0 0
        %790 = vmatprep.subr.bf16.mxu0 0
        %791 = vmatpush1.bf16.msra.mxu0 0
        %792 = vmatprep.subr.bf16.mxu0 0
        %793 = vmatpush1.bf16.msra.mxu0 0
        %794 = vmatprep.subr.bf16.mxu0 0
        %795 = vmatpush1.bf16.msra.mxu0 0
        %796 = vmatprep.subr.bf16.mxu0 0
        %797 = vmatpush1.bf16.msra.mxu0 0
        %798 = vmatprep.subr.bf16.mxu0 0
        %799 = vmatpush1.bf16.msra.mxu0 0
        %800 = vmatprep.subr.bf16.mxu0 0
        %801 = vmatpush1.bf16.msra.mxu0 0
        %802 = vmatprep.subr.bf16.mxu0 0
        %803 = vmatpush1.bf16.msra.mxu0 0
        %804 = vmatprep.subr.bf16.mxu0 0
        %805 = vmatpush1.bf16.msra.mxu0 0
        %806 = vmatprep.subr.bf16.mxu0 0
        %807 = vmatpush1.bf16.msra.mxu0 0
        %808 = vmatprep.subr.bf16.mxu0 0
        %809 = vmatpush1.bf16.msra.mxu0 0
        %810 = vmatprep.subr.bf16.mxu0 0
        %811 = vmatpush1.bf16.msra.mxu0 0
        %812 = vmatprep.subr.bf16.mxu0 0
        %813 = vmatpush1.bf16.msra.mxu0 0
        %814 = vmatprep.mubr.bf16.mxu0 0
        %815 = vmatmul.mubr.bf16.gmra.mrb[0].mxu0 %v780
        %v816 = vpop.f32.mrb[0].mxu0
        %v817 = vadd.f32 0.0, %v816
        %v818 = vpop.f32.mrb[0].mxu0
        %v819 = vpop.f32.mrb[0].mxu0
        %v820 = vadd.f32 0.0, %v819
        %v821 = vpop.f32.mrb[0].mxu0
        %822 = vdwg.mxu0
        %823 = vrot.lane.b32.xlu0 %v391, 64
        %v824 = vpop.permute.xlu0 %823
        %v827 = vsel %vm599, %v690, 0
        %829 = vmatprep.subr.bf16.mxu0 0
        %830 = vmatpush1.bf16.msra.mxu0 %v824
        %831 = vmatprep.subr.bf16.mxu0 0
        %832 = vmatpush1.bf16.msra.mxu0 0
        %833 = vmatprep.subr.bf16.mxu0 0
        %834 = vmatpush1.bf16.msra.mxu0 0
        %835 = vmatprep.subr.bf16.mxu0 0
        %836 = vmatpush1.bf16.msra.mxu0 0
        %837 = vmatprep.subr.bf16.mxu0 0
        %838 = vmatpush1.bf16.msra.mxu0 0
        %839 = vmatprep.subr.bf16.mxu0 0
        %840 = vmatpush1.bf16.msra.mxu0 0
        %841 = vmatprep.subr.bf16.mxu0 0
        %842 = vmatpush1.bf16.msra.mxu0 0
        %843 = vmatprep.subr.bf16.mxu0 0
        %844 = vmatpush1.bf16.msra.mxu0 0
        %845 = vmatprep.subr.bf16.mxu0 0
        %846 = vmatpush1.bf16.msra.mxu0 0
        %847 = vmatprep.subr.bf16.mxu0 0
        %848 = vmatpush1.bf16.msra.mxu0 0
        %849 = vmatprep.subr.bf16.mxu0 0
        %850 = vmatpush1.bf16.msra.mxu0 0
        %851 = vmatprep.subr.bf16.mxu0 0
        %852 = vmatpush1.bf16.msra.mxu0 0
        %853 = vmatprep.subr.bf16.mxu0 0
        %854 = vmatpush1.bf16.msra.mxu0 0
        %855 = vmatprep.subr.bf16.mxu0 0
        %856 = vmatpush1.bf16.msra.mxu0 0
        %857 = vmatprep.subr.bf16.mxu0 0
        %858 = vmatpush1.bf16.msra.mxu0 0
        %859 = vmatprep.subr.bf16.mxu0 0
        %860 = vmatpush1.bf16.msra.mxu0 0
        %861 = vmatprep.mubr.bf16.mxu0 0
        %862 = vmatmul.mubr.bf16.gmra.mrb[0].mxu0 %v827
        %v863 = vpop.f32.mrb[0].mxu0
        %v864 = vadd.f32 0.0, %v863
        %v865 = vpop.f32.mrb[0].mxu0
        %v866 = vpop.f32.mrb[0].mxu0
        %v867 = vadd.f32 0.0, %v866
        %v868 = vpop.f32.mrb[0].mxu0
        %869 = vdwg.mxu0
        %870 = vrot.lane.b32.xlu0 %v393, 64
        %v871 = vpop.permute.xlu0 %870
        %v874 = vsel %vm599, %v691, 0
        %876 = vmatprep.subr.bf16.mxu0 0
        %877 = vmatpush1.bf16.msra.mxu0 %v871
        %878 = vmatprep.subr.bf16.mxu0 0
        %879 = vmatpush1.bf16.msra.mxu0 0
        %880 = vmatprep.subr.bf16.mxu0 0
        %881 = vmatpush1.bf16.msra.mxu0 0
        %882 = vmatprep.subr.bf16.mxu0 0
        %883 = vmatpush1.bf16.msra.mxu0 0
        %884 = vmatprep.subr.bf16.mxu0 0
        %885 = vmatpush1.bf16.msra.mxu0 0
        %886 = vmatprep.subr.bf16.mxu0 0
        %887 = vmatpush1.bf16.msra.mxu0 0
        %888 = vmatprep.subr.bf16.mxu0 0
        %889 = vmatpush1.bf16.msra.mxu0 0
        %890 = vmatprep.subr.bf16.mxu0 0
        %891 = vmatpush1.bf16.msra.mxu0 0
        %892 = vmatprep.subr.bf16.mxu0 0
        %893 = vmatpush1.bf16.msra.mxu0 0
        %894 = vmatprep.subr.bf16.mxu0 0
        %895 = vmatpush1.bf16.msra.mxu0 0
        %896 = vmatprep.subr.bf16.mxu0 0
        %897 = vmatpush1.bf16.msra.mxu0 0
        %898 = vmatprep.subr.bf16.mxu0 0
        %899 = vmatpush1.bf16.msra.mxu0 0
        %900 = vmatprep.subr.bf16.mxu0 0
        %901 = vmatpush1.bf16.msra.mxu0 0
        %902 = vmatprep.subr.bf16.mxu0 0
        %903 = vmatpush1.bf16.msra.mxu0 0
        %904 = vmatprep.subr.bf16.mxu0 0
        %905 = vmatpush1.bf16.msra.mxu0 0
        %906 = vmatprep.subr.bf16.mxu0 0
        %907 = vmatpush1.bf16.msra.mxu0 0
        %908 = vmatprep.mubr.bf16.mxu0 0
        %909 = vmatmul.mubr.bf16.gmra.mrb[0].mxu0 %v874
        %v910 = vpop.f32.mrb[0].mxu0
        %v911 = vadd.f32 0.0, %v910
        %v912 = vpop.f32.mrb[0].mxu0
        %v913 = vpop.f32.mrb[0].mxu0
        %v914 = vadd.f32 0.0, %v913
        %v915 = vpop.f32.mrb[0].mxu0
        %916 = vdwg.mxu0
        %919 = vrot.lane.b32.xlu0 %v817, 8
        %v920 = vpop.permute.xlu0 %919
        %921 = vrot.lane.b32.xlu0 %v820, 8
        %v922 = vpop.permute.xlu0 %921
        %927 = vrot.lane.b32.xlu0 %v864, 16
        %v928 = vpop.permute.xlu0 %927
        %929 = vrot.lane.b32.xlu0 %v867, 16
        %v930 = vpop.permute.xlu0 %929
        %935 = vrot.lane.b32.xlu0 %v911, 24
        %v936 = vpop.permute.xlu0 %935
        %937 = vrot.lane.b32.xlu0 %v914, 24
        %v938 = vpop.permute.xlu0 %937
        %v941 = vsel %vm396, %v770, %v920
        %v942 = vsel %vm396, %v773, %v922
        %v943 = vsel %vm599, %v941, %v928
        %v944 = vsel %vm599, %v942, %v930
        %vm945 = vcmask 195584
        %v946 = vsel %vm945, %v943, %v936
        %v947 = vsel %vm945, %v944, %v938
        %v948 = vpack.c.bf16 %v947, %v946
        %v949 = vld [vmem:[#allocation7] sm:$0xf]
        %v950 = vld [vmem:[#allocation7 + $0x4] sm:$0xf]
        %v951 = vld [vmem:[#allocation7 + $0x8] sm:$0xf]
        %v952 = vld [vmem:[#allocation7 + $0xc] sm:$0xf]
        %v953 = vld [vmem:[%s4] sm:$0x1]
        %v955 = vlaneseq
        %v956 = vshrl.u32 %v955, 7
        %v957 = vsub.s32 0, %v956
        %v958 = vrot.slane %v953, %v957
        %v964 = vunpack.c.l.b16 %v949
        %v965 = vunpack.c.l.b16 %v950
        %v966 = vunpack.c.l.b16 %v951
        %v967 = vunpack.c.l.b16 %v952
        %v968 = vpack.c.b16 %v965, %v964
        %v969 = vpack.c.b16 %v967, %v966
        %v973 = vsel %vm341, %v948, 0
        %975 = vmatprep.subr.bf16.mxu0 0
        %976 = vmatpush1.bf16.msra.mxu0 %v968
        %977 = vmatprep.subr.bf16.mxu0 0
        %978 = vmatpush1.bf16.msra.mxu0 %v969
        %979 = vmatprep.subr.bf16.mxu0 0
        %980 = vmatpush1.bf16.msra.mxu0 0
        %981 = vmatprep.subr.bf16.mxu0 0
        %982 = vmatpush1.bf16.msra.mxu0 0
        %983 = vmatprep.subr.bf16.mxu0 0
        %984 = vmatpush1.bf16.msra.mxu0 0
        %985 = vmatprep.subr.bf16.mxu0 0
        %986 = vmatpush1.bf16.msra.mxu0 0
        %987 = vmatprep.subr.bf16.mxu0 0
        %988 = vmatpush1.bf16.msra.mxu0 0
        %989 = vmatprep.subr.bf16.mxu0 0
        %990 = vmatpush1.bf16.msra.mxu0 0
        %991 = vmatprep.subr.bf16.mxu0 0
        %992 = vmatpush1.bf16.msra.mxu0 0
        %993 = vmatprep.subr.bf16.mxu0 0
        %994 = vmatpush1.bf16.msra.mxu0 0
        %995 = vmatprep.subr.bf16.mxu0 0
        %996 = vmatpush1.bf16.msra.mxu0 0
        %997 = vmatprep.subr.bf16.mxu0 0
        %998 = vmatpush1.bf16.msra.mxu0 0
        %999 = vmatprep.subr.bf16.mxu0 0
        %1000 = vmatpush1.bf16.msra.mxu0 0
        %1001 = vmatprep.subr.bf16.mxu0 0
        %1002 = vmatpush1.bf16.msra.mxu0 0
        %1003 = vmatprep.subr.bf16.mxu0 0
        %1004 = vmatpush1.bf16.msra.mxu0 0
        %1005 = vmatprep.subr.bf16.mxu0 0
        %1006 = vmatpush1.bf16.msra.mxu0 0
        %1007 = vmatprep.mubr.bf16.mxu0 0
        %1008 = vmatmul.mubr.bf16.gmra.mrb[0].mxu0 %v973
        %v1009 = vpop.f32.mrb[0].mxu0
        %v1010 = vadd.f32 %v958, %v1009
        %v1011 = vpop.f32.mrb[0].mxu0
        %v1012 = vpop.f32.mrb[0].mxu0
        %v1013 = vadd.f32 %v958, %v1012
        %v1014 = vpop.f32.mrb[0].mxu0
        %1015 = vdwg.mxu0
        %1016 = vst.msk [vmem:[%s302] sm:$0xff] %vm341, %v1010
        %1017 = vst.msk [vmem:[%s302 + $0x8] sm:$0xff] %vm341, %v1013
        %s1018 = sand.u32 %s146, 1
        %s1019 = scalar_lea.sflag [#allocation4], %s1018
        %s1020 = sand.u32 %s146, 1
        %s1021 = smul.addr %s1020, 16
        %s1022 = scalar_lea.vmem [#allocation8], %s1021
        %s1023 = sand.u32 %s172, 1
        %s1024 = scalar_lea.sflag [#allocation10], %s1023
        %s1025 = sand.u32 %s172, 1
        %s1026 = smul.addr %s1025, 32
        %s1027 = scalar_lea.vmem [#allocation9], %s1026
        // Predicated region
        $region53: #{tpu_custom_call.1} parent=39 // pred_check
          %p1028 = pneg %p156
        $region54: #{tpu_custom_call.1} parent=39 // pred_check_branch
          %1030 = sbr.rel (%p1028) target = $region56
        $region55: #{tpu_custom_call.1} parent=39 // pred_region
          %s1032 = ssub.s32 256, 256
          %1033 = vsyncadd %s1019, %s1032
          %s1034 = smul.addr %s28, 2
          %s1035 = smul.addr %s1034, 128
          %s1036 = scalar_lea.hbm %s5, %s1035
          %s1037 = sshll.u32 %s1022, 4
          %s1038 = int_to_ptr.vmem [resolvable:$true] %s1037
          %1043 = dma.vmem_to_hbm [thread:$0]  %s1038, 256, %s1036, %s1019, 128, 128, 8
        $region56: #{tpu_custom_call.1} parent=39 // pred_fallthru
          _
        // Predicated region
        $region57: #{tpu_custom_call.1} parent=39 // pred_check
          %p1044 = pneg %p182
        $region58: #{tpu_custom_call.1} parent=39 // pred_check_branch
          %1046 = sbr.rel (%p1044) target = $region60
        $region59: #{tpu_custom_call.1} parent=39 // pred_region
          %s1048 = ssub.s32 512, 512
          %1049 = vsyncadd %s1024, %s1048
          %s1050 = smul.addr %s28, 8
          %s1051 = smul.addr %s1050, 64
          %s1052 = scalar_lea.hbm %s6, %s1051
          %s1053 = sshll.u32 %s1027, 4
          %s1054 = int_to_ptr.vmem [resolvable:$true] %s1053
          %1059 = dma.vmem_to_hbm [thread:$0]  %s1054, 512, %s1052, %s1024, 64, 64, 4
        $region60: #{tpu_custom_call.1} parent=39 // pred_fallthru
          _
      $region40: #{tpu_custom_call.1} parent=5 // pred_fallthru
        _
      %p1060 = scmp.le.s32.totalorder 2, %s23
      // Predicated region
      $region61: #{tpu_custom_call.1} parent=5 // pred_check
        %p1061 = pneg %p1060
      $region62: #{tpu_custom_call.1} parent=5 // pred_check_branch
        %1063 = sbr.rel (%p1061) target = $region64
      $region63: #{tpu_custom_call.1} parent=5 // pred_region
        %s1064 = ssub.s32 %s23, 2
        // Predicated region
        $region65: #{tpu_custom_call.1} parent=63 // pred_check
          %p1065 = pneg %p162
        $region66: #{tpu_custom_call.1} parent=63 // pred_check_branch
          %1067 = sbr.rel (%p1065) target = $region68
        $region67: #{tpu_custom_call.1} parent=63 // pred_region
          %s1068 = sand.u32 %s147, 1
          %s1069 = scalar_lea.sflag [#allocation4], %s1068
          %s1070 = sand.u32 %s147, 1
          %s1071 = smul.addr %s1070, 16
          %s1072 = scalar_lea.vmem [#allocation8], %s1071
          %1073 = dma.done %s1069, 256
        $region68: #{tpu_custom_call.1} parent=63 // pred_fallthru
          _
        // Predicated region
        $region69: #{tpu_custom_call.1} parent=63 // pred_check
          %p1074 = pneg %p188
        $region70: #{tpu_custom_call.1} parent=63 // pred_check_branch
          %1076 = sbr.rel (%p1074) target = $region72
        $region71: #{tpu_custom_call.1} parent=63 // pred_region
          %s1077 = sand.u32 %s173, 1
          %s1078 = scalar_lea.sflag [#allocation10], %s1077
          %s1079 = sand.u32 %s173, 1
          %s1080 = smul.addr %s1079, 32
          %s1081 = scalar_lea.vmem [#allocation9], %s1080
          %1082 = dma.done %s1078, 512
        $region72: #{tpu_custom_call.1} parent=63 // pred_fallthru
          _
      $region64: #{tpu_custom_call.1} parent=5 // pred_fallthru
        _
    $region6: #{tpu_custom_call.1} parent=1 // loop_footer
      %s27 = sadd.s32 1, %s23
    $region7: #{tpu_custom_call.1} parent=1 // loop_footer_branch
      %22 = sbr.rel target = $region3
    $region8: #{tpu_custom_call.1} parent=1 // loop_exit
      _
    %1083 = vsyncpa [#allocation3], 1
    %s1084 = scalar_lea.sflag [#allocation3], 1
    %1085 = vsyncpa %s1084, 1
    %1086 = vsyncpa [#allocation6], 1
    %1087 = vsyncpa [#allocation4], 1
    %s1088 = scalar_lea.sflag [#allocation4], 1
    %1089 = vsyncpa %s1088, 1
    %1090 = vsyncpa [#allocation10], 1
    %s1091 = scalar_lea.sflag [#allocation10], 1
    %1092 = vsyncpa %s1091, 1

</llo_original>
